<compile_context>
chip_gen: v7x
topology: tpu7x:2x2x1
jax: 0.10.0
libtpu: 0.0.40
codegen_flags: <defaults>
</compile_context>

<pallas_src>
import functools

import numpy as np

import jax
import jax.numpy as jnp
from jax.experimental import pallas as pl
from jax.experimental.pallas import tpu as pltpu


_LANE_TILES = (131072, 65536, 32768, 16384, 8192, 4096, 2048, 1024, 512)
_X_VMEM_BUDGET = 16 * 1024 * 1024       # x tiles (double-buffered) + temps
_VMEM_LIMIT_BYTES = 32 * 1024 * 1024    # explicit scoped-VMEM limit, safe on all gens


def _device_kind():
    try:
        return jax.devices()[0].device_kind.lower()
    except Exception:
        return ""


def _num_core_splits(kind, n):
    # Only chips exposing >1 TensorCore (v7x) benefit from the leading
    # "parallel" split; on single-TC v5e/v6e it just doubles the padding
    # granularity and adds a mid-stream pipeline drain.
    # TODO(synk): on v7x, verify with an xprof per-core trace that "parallel"
    # actually shards this axis across the 2 TCs; if not, switch it to
    # pltpu.CORE_PARALLEL.
    if "v7" in kind and n > _LANE_TILES[-1]:
        return 2
    return 1


def _has_bf16_valu(kind):
    # v5e has no bf16 VALU; keep the elementwise math in f32 there.
    return not ("v5 lite" in kind or "v5e" in kind or "v5litepod" in kind)


def _choose_tiling(n, d, itemsize, num_splits):
    """Pick (lane_tile, padded_atom_count); VMEM- and D-aware."""
    n = max(int(n), 1)
    # Per atom-lane VMEM: 2 double-buffered (D, tn) x tiles + ~1 (D, tn)
    # product temp at `itemsize`, plus a few sublane-padded (8, tn) f32 rows.
    d_pad = max(-(-int(d) // 16) * 16, 16)
    per_lane = 3 * d_pad * itemsize + 4 * 8 * 4
    fitting = [t for t in _LANE_TILES if t * per_lane <= _X_VMEM_BUDGET]
    if not fitting:
        fitting = [_LANE_TILES[-1]]

    def plan(t):
        chunk = num_splits * t
        n_pad = -(-n // chunk) * chunk
        return t, n_pad, n_pad // chunk

    # Largest tile that keeps >= 2 pipelined steps per core and <= 25% padding.
    for t in fitting:
        tile, n_pad, steps = plan(t)
        if steps >= 2 and n_pad <= 1.25 * n:
            return tile, n_pad
    # Otherwise largest tile with <= 25% padding.
    for t in fitting:
        tile, n_pad, _ = plan(t)
        if n_pad <= 1.25 * n:
            return tile, n_pad
    tile, n_pad, _ = plan(fitting[-1])
    return tile, n_pad


def _readout_kernel(x_ref, w_ref, b_ref, out_ref, *, n_valid, n_pad, tn,
                    mul_dtype, activation):
    """One (D, tn) tile of lane-major atomic features -> (1, 128) partial sums."""
    c = pl.program_id(0)                   # core-split index
    j = pl.program_id(1)                   # reduction step within this core
    g = c * pl.num_programs(1) + j         # global lane-tile index

    @pl.when(j == 0)
    def _():
        out_ref[...] = jnp.zeros_like(out_ref)

    # Linear(dim_atoms, 1): VPU multiply (bf16 where the VALU supports it,
    # else f32) + f32 sublane reduction over the feature axis.
    x = x_ref[...].astype(mul_dtype)                                  # (D, tn)
    w = w_ref[...].astype(mul_dtype)                                  # (D, 1)
    z = jnp.sum((x * w).astype(jnp.float32), axis=0, keepdims=True)   # (1, tn)
    t = activation(z + b_ref[0])                                      # (1, tn)

    def lane_fold(v):
        # Pairwise tree-reduce the (1, tn) row into a single (1, 128) vreg via
        # 128-aligned lane slices: no relayout, no wide VMEM accumulator.
        parts = [v[:, k * 128:(k + 1) * 128] for k in range(tn // 128)]
        while len(parts) > 1:
            tail = [parts[-1]] if len(parts) % 2 else []
            parts = [p + q for p, q in zip(parts[0::2], parts[1::2])] + tail
        return parts[0]

    if n_pad == n_valid:
        # No padded atoms at all: every tile takes the mask-free fast path.
        out_ref[...] += lane_fold(t)
    else:
        first_padded_tile = n_valid // tn   # static Python int

        @pl.when(g < first_padded_tile)
        def _():
            out_ref[...] += lane_fold(t)

        @pl.when(g >= first_padded_tile)
        def _():
            # Only boundary / fully-padded tiles pay for the iota + select.
            col = g * tn + jax.lax.broadcasted_iota(jnp.int32, t.shape, 1)
            out_ref[...] += lane_fold(jnp.where(col < n_valid, t, 0.0))


@functools.partial(jax.jit, static_argnames=("activation_fn", "compute_dtype"))
def _readout_jit(ys, w, b, *, activation_fn, compute_dtype):
    d = int(ys[0].shape[1])
    n = sum(int(y.shape[0]) for y in ys)

    kind = _device_kind()
    num_splits = _num_core_splits(kind, n)
    stream_dtype = np.dtype(compute_dtype)
    use_bf16_mul = (stream_dtype == np.dtype(jnp.bfloat16)) and _has_bf16_valu(kind)
    mul_dtype = jnp.bfloat16 if use_bf16_mul else jnp.float32

    tn, n_pad = _choose_tiling(n, d, stream_dtype.itemsize, num_splits)
    steps = n_pad // (num_splits * tn)

    # Build the lane-major (D, N_pad) slab directly: per-molecule transposes
    # concatenated along the atom axis, with the zero padding folded into the
    # same single materialisation (no separate full-array transpose pass).
    blocks = [jnp.asarray(y, compute_dtype).T for y in ys]
    if n_pad > n:
        blocks.append(jnp.zeros((d, n_pad - n), compute_dtype))
    x_t = jnp.concatenate(blocks, axis=1) if len(blocks) > 1 else blocks[0]

    w2 = jnp.asarray(w, jnp.float32).reshape(d, 1)     # tiny resident VMEM block
    b1 = jnp.asarray(b, jnp.float32).reshape(-1)[:1]   # single SMEM scalar

    kernel = functools.partial(
        _readout_kernel, n_valid=n, n_pad=n_pad, tn=tn,
        mul_dtype=mul_dtype, activation=activation_fn)

    partials = pl.pallas_call(
        kernel,
        out_shape=jax.ShapeDtypeStruct((1, 128 * num_splits), jnp.float32),
        grid=(num_splits, steps),
        in_specs=[
            # x_t: (D, N_pad) streamed as lane-dense (D, tn) tiles.
            pl.BlockSpec((d, tn), lambda c, j: (0, c * steps + j)),
            # w: constant block index -> fetched once, stays resident.
            pl.BlockSpec((d, 1), lambda c, j: (0, 0)),
            # bias: a single scalar kept in SMEM.
            pl.BlockSpec(memory_space=pltpu.SMEM),
        ],
        # Lane-dense (1, 128) partial-sum slab per core split; the block index
        # is constant over the reduction axis so it acts as the accumulator.
        out_specs=pl.BlockSpec((1, 128), lambda c, j: (0, c)),
        compiler_params=pltpu.CompilerParams(
            dimension_semantics=("parallel", "arbitrary"),
            vmem_limit_bytes=_VMEM_LIMIT_BYTES,
        ),
    )(x_t, w2, b1)
    return jnp.sum(partials)   # fold per-core 128-lane partials to the scalar


def readout_layer(data, w, b, *, activation_fn=jnp.tanh, compute_dtype=jnp.bfloat16):
    """ReadoutLayer.forward: sum(activation(Linear(cat(data['y']))))."""
    # TODO(synk): activation_fn must be a jnp-traceable elementwise callable
    # (jnp.tanh default); arbitrary torch callables are not translatable, and
    # the torch `device` constructor argument has no JAX equivalent.
    return _readout_jit(tuple(data["y"]), w, b,
                        activation_fn=activation_fn, compute_dtype=compute_dtype)


if __name__ == "__main__":
    dim_atoms = 32

    key = jax.random.PRNGKey(0)
    k_w, k_b, k_y0, k_y1, k_y2, k_big = jax.random.split(key, 6)

    # Deterministic init for Linear(dim_atoms, 1): weight (D, 1), bias (1,).
    w = (jax.random.normal(k_w, (dim_atoms, 1), dtype=jnp.float32)
         / jnp.sqrt(jnp.float32(dim_atoms)))
    b = jax.random.normal(k_b, (1,), dtype=jnp.float32) * 0.1

    # data['y'] is a list of per-molecule atomic representations.
    data = {
        "y": [
            jax.random.normal(k_y0, (5, dim_atoms), dtype=jnp.float32),
            jax.random.normal(k_y1, (7, dim_atoms), dtype=jnp.float32),
            jax.random.normal(k_y2, (4, dim_atoms), dtype=jnp.float32),
        ]
    }

    def ref_readout(ys):
        # Pure-f32 elementwise reference (avoids TPU low-precision matmul paths).
        x = jnp.concatenate(ys, axis=0).astype(jnp.float32)
        z = jnp.sum(x * w[:, 0][None, :], axis=-1, keepdims=True) + b
        return jnp.sum(jnp.tanh(z))

    ref = ref_readout(data["y"])

    # Default (bf16-streamed, bf16 multiply on v6e/v7x) path: coarse check.
    out = jax.block_until_ready(readout_layer(data, w, b))
    assert jnp.allclose(out, ref, rtol=5e-2, atol=1.5e-1), (out, ref)

    # f32 streaming + f32 VPU math: tight check.
    out_f32 = jax.block_until_ready(
        readout_layer(data, w, b, compute_dtype=jnp.float32))
    assert jnp.allclose(out_f32, ref, rtol=1e-4, atol=1e-4), (out_f32, ref)

    # Larger input: exercises multi-step accumulation and the mask-free
    # fast path for fully-valid tiles.
    big = {"y": [jax.random.normal(k_big, (1200, dim_atoms), dtype=jnp.float32)]}
    ref_big = ref_readout(big["y"])
    out_big = jax.block_until_ready(
        readout_layer(big, w, b, compute_dtype=jnp.float32))
    assert jnp.allclose(out_big, ref_big, rtol=1e-3, atol=5e-3), (out_big, ref_big)

    print("KERNEL_OK")
</pallas_src>

<mosaic_0001>
module attributes {stable_mosaic.version = 11 : i64} {
  func.func @_readout_kernel(%arg0: i32, %arg1: i32, %arg2: memref<32x512xbf16, #tpu.memory_space<vmem>>, %arg3: memref<32x1xf32, #tpu.memory_space<vmem>>, %arg4: memref<1xf32, #tpu.memory_space<smem>>, %arg5: memref<1x128xf32, #tpu.memory_space<vmem>>) attributes {dimension_semantics = [#tpu.dimension_semantics<parallel>, #tpu.dimension_semantics<arbitrary>], iteration_bounds = array<i64: 1, 1>, scalar_prefetch = 0 : i64, scratch_operands = 0 : i64, tpu.core_type = #tpu.core_type<tc>, window_params = [{transform_indices = @transform_0, window_bounds = array<i64: 32, 512>}, {pipeline_mode = #tpu.pipeline_mode<synchronous>, transform_indices = @transform_1, window_bounds = array<i64: 32, 1>}, {transform_indices = @transform_2, window_bounds = array<i64: 1>}, {transform_indices = @transform_3, window_bounds = array<i64: 1, 128>}]} {
    %c1_i32 = arith.constant 1 : i32
    %0 = arith.muli %arg0, %c1_i32 : i32
    %1 = arith.addi %0, %arg1 : i32
    %c0_i32 = arith.constant 0 : i32
    %2 = arith.cmpi eq, %arg1, %c0_i32 : i32
    %3 = arith.extui %2 : i1 to i32
    %c0_i32_0 = arith.constant 0 : i32
    %4 = arith.cmpi ne, %3, %c0_i32_0 : i32
    scf.if %4 {
      %cst_9 = arith.constant 0.000000e+00 : f32
      %23 = vector.broadcast %cst_9 : f32 to vector<1x128xf32>
      %c0_10 = arith.constant 0 : index
      %c0_11 = arith.constant 0 : index
      %24 = vector.load %arg5[%c0_10, %c0_11] : memref<1x128xf32, #tpu.memory_space<vmem>>, vector<1x128xf32>
      tpu.vector_store %arg5[%c0_10, %c0_11], %23 {strides = array<i32>} : memref<1x128xf32, #tpu.memory_space<vmem>>, vector<1x128xf32>,
    } else {
    }
    %c0 = arith.constant 0 : index
    %c0_1 = arith.constant 0 : index
    %5 = vector.load %arg2[%c0, %c0_1] : memref<32x512xbf16, #tpu.memory_space<vmem>>, vector<32x512xbf16>
    %c0_2 = arith.constant 0 : index
    %c0_3 = arith.constant 0 : index
    %6 = vector.load %arg3[%c0_2, %c0_3] : memref<32x1xf32, #tpu.memory_space<vmem>>, vector<32x1xf32>
    %7 = arith.truncf %6 : vector<32x1xf32> to vector<32x1xbf16>
    %8 = vector.broadcast %7 : vector<32x1xbf16> to vector<32x512xbf16>
    %9 = arith.mulf %5, %8 : vector<32x512xbf16>
    %10 = arith.extf %9 : vector<32x512xbf16> to vector<32x512xf32>
    %cst = arith.constant dense<0.000000e+00> : vector<512xf32>
    %11 = vector.multi_reduction <add>, %10, %cst [0] : vector<32x512xf32> to vector<512xf32>
    %12 = vector.shape_cast %11 : vector<512xf32> to vector<1x512xf32>
    %c0_4 = arith.constant 0 : index
    %13 = memref.load %arg4[%c0_4] : memref<1xf32, #tpu.memory_space<smem>>
    %14 = vector.broadcast %13 : f32 to vector<1x512xf32>
    %15 = arith.addf %12, %14 : vector<1x512xf32>
    %16 = math.tanh %15 : vector<1x512xf32>
    %c0_i32_5 = arith.constant 0 : i32
    %17 = arith.cmpi slt, %1, %c0_i32_5 : i32
    %18 = arith.extui %17 : i1 to i32
    %c0_i32_6 = arith.constant 0 : i32
    %19 = arith.cmpi ne, %18, %c0_i32_6 : i32
    scf.if %19 {
      %c0_9 = arith.constant 0 : index
      %c0_10 = arith.constant 0 : index
      %23 = vector.load %arg5[%c0_9, %c0_10] : memref<1x128xf32, #tpu.memory_space<vmem>>, vector<1x128xf32>
      %24 = vector.extract_strided_slice %16 {offsets = [0, 0], sizes = [1, 128], strides = [1, 1]} : vector<1x512xf32> to vector<1x128xf32>
      %25 = vector.extract_strided_slice %16 {offsets = [0, 128], sizes = [1, 128], strides = [1, 1]} : vector<1x512xf32> to vector<1x128xf32>
      %26 = vector.extract_strided_slice %16 {offsets = [0, 256], sizes = [1, 128], strides = [1, 1]} : vector<1x512xf32> to vector<1x128xf32>
      %27 = vector.extract_strided_slice %16 {offsets = [0, 384], sizes = [1, 128], strides = [1, 1]} : vector<1x512xf32> to vector<1x128xf32>
      %28 = arith.addf %24, %25 : vector<1x128xf32>
      %29 = arith.addf %26, %27 : vector<1x128xf32>
      %30 = arith.addf %28, %29 : vector<1x128xf32>
      %31 = arith.addf %23, %30 : vector<1x128xf32>
      %c0_11 = arith.constant 0 : index
      %c0_12 = arith.constant 0 : index
      %32 = vector.load %arg5[%c0_11, %c0_12] : memref<1x128xf32, #tpu.memory_space<vmem>>, vector<1x128xf32>
      tpu.vector_store %arg5[%c0_11, %c0_12], %31 {strides = array<i32>} : memref<1x128xf32, #tpu.memory_space<vmem>>, vector<1x128xf32>,
    } else {
    }
    %c0_i32_7 = arith.constant 0 : i32
    %20 = arith.cmpi sge, %1, %c0_i32_7 : i32
    %21 = arith.extui %20 : i1 to i32
    %c0_i32_8 = arith.constant 0 : i32
    %22 = arith.cmpi ne, %21, %c0_i32_8 : i32
    scf.if %22 {
      %c512_i32 = arith.constant 512 : i32
      %23 = arith.muli %1, %c512_i32 : i32
      %24 = tpu.iota {dimensions = array<i32: 1>} : vector<1x512xi32>
      %25 = vector.broadcast %23 : i32 to vector<1x512xi32>
      %26 = arith.addi %25, %24 : vector<1x512xi32>
      %c0_9 = arith.constant 0 : index
      %c0_10 = arith.constant 0 : index
      %27 = vector.load %arg5[%c0_9, %c0_10] : memref<1x128xf32, #tpu.memory_space<vmem>>, vector<1x128xf32>
      %c16_i32 = arith.constant 16 : i32
      %28 = vector.broadcast %c16_i32 : i32 to vector<1x512xi32>
      %29 = arith.cmpi slt, %26, %28 : vector<1x512xi32>
      %cst_11 = arith.constant 0.000000e+00 : f32
      %30 = vector.broadcast %cst_11 : f32 to vector<1x512xf32>
      %31 = arith.select %29, %16, %30 : vector<1x512xi1>, vector<1x512xf32>
      %32 = vector.extract_strided_slice %31 {offsets = [0, 0], sizes = [1, 128], strides = [1, 1]} : vector<1x512xf32> to vector<1x128xf32>
      %33 = vector.extract_strided_slice %31 {offsets = [0, 128], sizes = [1, 128], strides = [1, 1]} : vector<1x512xf32> to vector<1x128xf32>
      %34 = vector.extract_strided_slice %31 {offsets = [0, 256], sizes = [1, 128], strides = [1, 1]} : vector<1x512xf32> to vector<1x128xf32>
      %35 = vector.extract_strided_slice %31 {offsets = [0, 384], sizes = [1, 128], strides = [1, 1]} : vector<1x512xf32> to vector<1x128xf32>
      %36 = arith.addf %32, %33 : vector<1x128xf32>
      %37 = arith.addf %34, %35 : vector<1x128xf32>
      %38 = arith.addf %36, %37 : vector<1x128xf32>
      %39 = arith.addf %27, %38 : vector<1x128xf32>
      %c0_12 = arith.constant 0 : index
      %c0_13 = arith.constant 0 : index
      %40 = vector.load %arg5[%c0_12, %c0_13] : memref<1x128xf32, #tpu.memory_space<vmem>>, vector<1x128xf32>
      tpu.vector_store %arg5[%c0_12, %c0_13], %39 {strides = array<i32>} : memref<1x128xf32, #tpu.memory_space<vmem>>, vector<1x128xf32>,
    } else {
    }
    return
  }
  func.func @transform_0(%arg0: i32, %arg1: i32) -> (i32, i32) {
    %c1_i32 = arith.constant 1 : i32
    %0 = arith.muli %arg0, %c1_i32 : i32
    %1 = arith.addi %0, %arg1 : i32
    %c0_i32 = arith.constant 0 : i32
    %c0_i32_0 = arith.constant 0 : i32
    return %c0_i32, %1 : i32, i32
  }
  func.func @transform_1(%arg0: i32, %arg1: i32) -> (i32, i32) {
    %c0_i32 = arith.constant 0 : i32
    %c0_i32_0 = arith.constant 0 : i32
    %c0_i32_1 = arith.constant 0 : i32
    return %c0_i32, %c0_i32_0 : i32, i32
  }
  func.func @transform_2(%arg0: i32, %arg1: i32) -> i32 {
    %c0_i32 = arith.constant 0 : i32
    %c0_i32_0 = arith.constant 0 : i32
    return %c0_i32 : i32
  }
  func.func @transform_3(%arg0: i32, %arg1: i32) -> (i32, i32) {
    %c0_i32 = arith.constant 0 : i32
    %c0_i32_0 = arith.constant 0 : i32
    return %c0_i32, %arg0 : i32, i32
  }
}

</mosaic_0001>

<llo_original>
// kernel: _readout_jit.1
$region0: #{_readout_jit.1}
  #allocation0 [shape = 'u32[]', space=smem, size = 0x4, offset = 0x4, fixed_abs, tag = 'smem constant byte address 0x4 - core index']
  #allocation1 [shape = 'u32[144,128]{1,0:T(1,128)}', space=vmem, size = 0x12000, scoped, tag = 'internal scratch']
  #allocation2 [shape = 'f32[1]{0:T(128)S(6)}', space=smem, size = 0x200, scoped, tag = 'scoped memory for _readout_jit.1']
  %s0 = inlined_call_operand.vmem [shape: bf16[32,512], index: 0, kind: input, shape index: {}]
  %s1 = inlined_call_operand.vmem [shape: f32[32,1], index: 1, kind: input, shape index: {}]
  %s2 = inlined_call_operand.<no memory space> [shape: f32[1], index: 2, kind: input, shape index: {}]
  %s3 = inlined_call_operand.vmem [shape: f32[1,128], index: 3, kind: output, shape index: {}]
  %s4 = sld [smem:[#allocation0]]
  $region34: #{_readout_jit.1} parent=0
    _
  %s6 = ssub.s32 1, %s4
  %s7 = scalar_select 0, %s6, %s4
  %8 = sst [smem:[#allocation2]] %s2
  // Predicated region
  $region2: #{_readout_jit.1} parent=0 // pred_check
    _
  $region3: #{_readout_jit.1} parent=0 // pred_check_branch
    %10 = sbr.rel (0) target = $region5
  $region4: #{_readout_jit.1} parent=0 // pred_region
    %s11 = sadd.s32 0, 0
    %s12 = smul.u32 4, %s11
    %p13 = scmp.lt.s32.totalorder %s12, 3
    %s14 = scalar_select %p13, %s12, 3
    %s15 = smul.addr %s14, 4
    %s16 = scalar_lea.vmem %s0, %s15
    %s17 = sadd.s32 0, 0
    %s18 = smul.u32 4, %s17
  $region5: #{_readout_jit.1} parent=0 // pred_fallthru
    _
  // Predicated region
  $region6: #{_readout_jit.1} parent=0 // pred_check
    _
  $region7: #{_readout_jit.1} parent=0 // pred_check_branch
    %20 = sbr.rel (0) target = $region9
  $region8: #{_readout_jit.1} parent=0 // pred_region
    _
  $region9: #{_readout_jit.1} parent=0 // pred_fallthru
    _
  // Predicated region
  $region10: #{_readout_jit.1} parent=0 // pred_check
    _
  $region11: #{_readout_jit.1} parent=0 // pred_check_branch
    %22 = sbr.rel (0) target = $region13
  $region12: #{_readout_jit.1} parent=0 // pred_region
    _
  $region13: #{_readout_jit.1} parent=0 // pred_fallthru
    _
  %s23 = sadd.s32 0, 0
  %s24 = smul.u32 4, %s23
  %p25 = scmp.lt.s32.totalorder %s24, 3
  %s26 = scalar_select %p25, %s24, 3
  %s27 = smul.addr %s26, 4
  %s28 = scalar_lea.vmem %s0, %s27
  %s29 = sadd.s32 0, 0
  %s30 = smul.u32 4, %s29
  %p31 = scmp.lt.s32.totalorder %s30, 3
  %s32 = scalar_select %p31, %s30, 3
  %s33 = smul.addr %s32, 4
  %s34 = scalar_lea.vmem %s0, %s33
  %s35 = sadd.s32 0, 0
  %s36 = smul.u32 4, %s35
  %s37 = sadd.s32 0, 0
  %p38 = scmp.eq.s32.totalorder 0, 0
  // Predicated region
  $region14: #{_readout_jit.1} parent=0 // pred_check
    %p39 = pneg %p38
  $region15: #{_readout_jit.1} parent=0 // pred_check_branch
    %41 = sbr.rel (%p39) target = $region17
  $region16: #{_readout_jit.1} parent=0 // pred_region
    %42 = vst [vmem:[%s3] sm:$0x1] 0.0
  $region17: #{_readout_jit.1} parent=0 // pred_fallthru
    _
  %v43 = vld [vmem:[%s34] sm:$0xff]
  %v44 = vld [vmem:[%s34 + $0x8] sm:$0xff]
  %v45 = vld [vmem:[%s34 + $0x10] sm:$0xff]
  %v46 = vld [vmem:[%s34 + $0x18] sm:$0xff]
  %v47 = vld [vmem:[%s34 + $0x20] sm:$0xff]
  %v48 = vld [vmem:[%s34 + $0x28] sm:$0xff]
  %v49 = vld [vmem:[%s34 + $0x30] sm:$0xff]
  %v50 = vld [vmem:[%s34 + $0x38] sm:$0xff]
  %v51 = vld [vmem:[%s1] sm:$0xff]
  %v52 = vld [vmem:[%s1 + $0x8] sm:$0xff]
  %v53 = vld [vmem:[%s1 + $0x10] sm:$0xff]
  %v54 = vld [vmem:[%s1 + $0x18] sm:$0xff]
  %v55 = vpack.c.bf16 %v52, %v51
  %v56 = vpack.c.bf16 %v54, %v53
  %58 = vset.pattern.permute.xlu0 0
  %59 = vperm.xlu0 %58, %v55
  %v60 = vpop.permute.xlu0 %59
  %62 = vset.pattern.permute.xlu0 0
  %63 = vperm.xlu0 %62, %v56
  %v64 = vpop.permute.xlu0 %63
  %v68 = vunpack.c.l.s4 839922192
  %v69 = vunpack.c.0.s8 %v68
  %v70 = vlaneseq
  %v71 = vshrl.u32 %v70, 7
  %v72 = vsub.s32 %v69, %v71
  %v73 = vrot.slane %v60, %v72
  %v75 = vunpack.c.l.s4 1985246804
  %v76 = vunpack.c.0.s8 %v75
  %v77 = vlaneseq
  %v78 = vshrl.u32 %v77, 7
  %v79 = vsub.s32 %v76, %v78
  %v80 = vrot.slane %v60, %v79
  %v82 = vunpack.c.l.s4 839922192
  %v83 = vunpack.c.0.s8 %v82
  %v84 = vlaneseq
  %v85 = vshrl.u32 %v84, 7
  %v86 = vsub.s32 %v83, %v85
  %v87 = vrot.slane %v64, %v86
  %v89 = vunpack.c.l.s4 1985246804
  %v90 = vunpack.c.0.s8 %v89
  %v91 = vlaneseq
  %v92 = vshrl.u32 %v91, 7
  %v93 = vsub.s32 %v90, %v92
  %v94 = vrot.slane %v64, %v93
  %v99 = vmul.bf16 %v43, %v73
  %v100 = vmul.bf16 %v44, %v73
  %v101 = vmul.bf16 %v45, %v80
  %v102 = vmul.bf16 %v46, %v80
  %v103 = vmul.bf16 %v47, %v87
  %v104 = vmul.bf16 %v48, %v87
  %v105 = vmul.bf16 %v49, %v94
  %v106 = vmul.bf16 %v50, %v94
  %v107 = vunpack.c.l.bf16 %v99
  %v108 = vunpack.c.h.bf16 %v99
  %v109 = vunpack.c.l.bf16 %v100
  %v110 = vunpack.c.h.bf16 %v100
  %v111 = vunpack.c.l.bf16 %v101
  %v112 = vunpack.c.h.bf16 %v101
  %v113 = vunpack.c.l.bf16 %v102
  %v114 = vunpack.c.h.bf16 %v102
  %v115 = vunpack.c.l.bf16 %v103
  %v116 = vunpack.c.h.bf16 %v103
  %v117 = vunpack.c.l.bf16 %v104
  %v118 = vunpack.c.h.bf16 %v104
  %v119 = vunpack.c.l.bf16 %v105
  %v120 = vunpack.c.h.bf16 %v105
  %v121 = vunpack.c.l.bf16 %v106
  %v122 = vunpack.c.h.bf16 %v106
  %v123 = vadd.f32 %v107, %v111
  %v124 = vadd.f32 %v123, %v115
  %v125 = vadd.f32 %v124, %v119
  %v126 = vrot.slane %v125, 4
  %v127 = vadd.f32 %v125, %v126
  %v128 = vrot.slane %v127, 2
  %v129 = vadd.f32 %v127, %v128
  %v130 = vrot.slane %v129, 1
  %v131 = vadd.f32 %v129, %v130
  %v132 = vadd.f32 %v108, %v112
  %v133 = vadd.f32 %v132, %v116
  %v134 = vadd.f32 %v133, %v120
  %v135 = vrot.slane %v134, 4
  %v136 = vadd.f32 %v134, %v135
  %v137 = vrot.slane %v136, 2
  %v138 = vadd.f32 %v136, %v137
  %v139 = vrot.slane %v138, 1
  %v140 = vadd.f32 %v138, %v139
  %v141 = vadd.f32 %v109, %v113
  %v142 = vadd.f32 %v141, %v117
  %v143 = vadd.f32 %v142, %v121
  %v144 = vrot.slane %v143, 4
  %v145 = vadd.f32 %v143, %v144
  %v146 = vrot.slane %v145, 2
  %v147 = vadd.f32 %v145, %v146
  %v148 = vrot.slane %v147, 1
  %v149 = vadd.f32 %v147, %v148
  %v150 = vadd.f32 %v110, %v114
  %v151 = vadd.f32 %v150, %v118
  %v152 = vadd.f32 %v151, %v122
  %v153 = vrot.slane %v152, 4
  %v154 = vadd.f32 %v152, %v153
  %v155 = vrot.slane %v154, 2
  %v156 = vadd.f32 %v154, %v155
  %v157 = vrot.slane %v156, 1
  %v158 = vadd.f32 %v156, %v157
  %s159 = sld [smem:[#allocation2]]
  %v160 = vstv %s159
  %v161 = vadd.f32 %v131, %v160
  %v162 = vadd.f32 %v140, %v160
  %v163 = vadd.f32 %v149, %v160
  %v164 = vadd.f32 %v158, %v160
  %v165 = vtanh.pop %v161
  %v166 = vtanh.pop %v162
  %v167 = vtanh.pop %v163
  %v168 = vtanh.pop %v164
  %p169 = scmp.lt.s32.totalorder %s37, 0
  // Predicated region
  $region18: #{_readout_jit.1} parent=0 // pred_check
    %p170 = pneg %p169
  $region19: #{_readout_jit.1} parent=0 // pred_check_branch
    %172 = sbr.rel (%p170) target = $region21
  $region20: #{_readout_jit.1} parent=0 // pred_region
    %v173 = vld [vmem:[%s3] sm:$0x1]
    %v174 = vadd.f32 %v165, %v166
    %v175 = vadd.f32 %v167, %v168
    %v176 = vadd.f32 %v174, %v175
    %v177 = vadd.f32 %v173, %v176
    %178 = vst [vmem:[%s3] sm:$0x1] %v177
  $region21: #{_readout_jit.1} parent=0 // pred_fallthru
    _
  %p179 = scmp.ge.s32.totalorder %s37, 0
  // Predicated region
  $region22: #{_readout_jit.1} parent=0 // pred_check
    %p180 = pneg %p179
  $region23: #{_readout_jit.1} parent=0 // pred_check_branch
    %182 = sbr.rel (%p180) target = $region25
  $region24: #{_readout_jit.1} parent=0 // pred_region
    %s183 = smul.u32 %s37, 512
    %v184 = vlaneseq
    %v185 = vand.u32 %v184, 127
    %v186 = vadd.s32 %v185, 128
    %v187 = vadd.s32 %v185, 256
    %v188 = vadd.s32 %v185, 384
    %v189 = vstv %s183
    %v190 = vadd.s32 %v189, %v185
    %v191 = vadd.s32 %v189, %v186
    %v192 = vadd.s32 %v189, %v187
    %v193 = vadd.s32 %v189, %v188
    %v194 = vld [vmem:[%s3] sm:$0x1]
    %vm195 = vcmp.lt.s32.totalorder %v190, 16
    %vm196 = vcmp.lt.s32.totalorder %v191, 16
    %vm197 = vcmp.lt.s32.totalorder %v192, 16
    %vm198 = vcmp.lt.s32.totalorder %v193, 16
    %v199 = vsel %vm195, %v165, 0.0
    %v200 = vsel %vm196, %v166, 0.0
    %v201 = vsel %vm197, %v167, 0.0
    %v202 = vsel %vm198, %v168, 0.0
    %v203 = vadd.f32 %v199, %v200
    %v204 = vadd.f32 %v201, %v202
    %v205 = vadd.f32 %v203, %v204
    %v206 = vadd.f32 %v194, %v205
    %207 = vst [vmem:[%s3] sm:$0x1] %v206
  $region25: #{_readout_jit.1} parent=0 // pred_fallthru
    _
  // Predicated region
  $region26: #{_readout_jit.1} parent=0 // pred_check
    _
  $region27: #{_readout_jit.1} parent=0 // pred_check_branch
    %209 = sbr.rel (0) target = $region29
  $region28: #{_readout_jit.1} parent=0 // pred_region
    _
  $region29: #{_readout_jit.1} parent=0 // pred_fallthru
    _
  // Predicated region
  $region30: #{_readout_jit.1} parent=0 // pred_check
    _
  $region31: #{_readout_jit.1} parent=0 // pred_check_branch
    %211 = sbr.rel (0) target = $region33
  $region32: #{_readout_jit.1} parent=0 // pred_region
    _
  $region33: #{_readout_jit.1} parent=0 // pred_fallthru
    _

</llo_original>
